<compile_context>
chip_gen: v7x
topology: tpu7x:2x2x1
jax: 0.10.0
libtpu: 0.0.40
codegen_flags: <defaults>
</compile_context>

<pallas_src>
import functools

import jax
import jax.numpy as jnp
from jax.experimental import pallas as pl
from jax.experimental.pallas import tpu as pltpu


def rbf_kernel(x_ref, xn_ref, ct_ref, col_ref, o_ref):
    # x_ref:   (tN, D)   input rows (f32)
    # xn_ref:  (tN, 1)   precomputed ||x||^2 per row
    # ct_ref:  (D, tK)   centres^T, columns pre-scaled by 2*sigma^2
    # col_ref: (2, tK)   row 0: sigma^2, row 1: ||c||^2 * sigma^2
    # o_ref:   (tN, tK)
    # Dominant FLOPs on the MXU (f32 matmul).
    xc = jnp.dot(x_ref[...], ct_ref[...], preferred_element_type=jnp.float32)

    col = col_ref[...]
    s2 = col[0:1, :]        # (1, tK)
    cns2 = col[1:2, :]      # (1, tK)

    # t = -(||x - c|| * sigma)^2 = 2*s2*<x,c> - s2*||x||^2 - s2*||c||^2
    t = xc - xn_ref[...] * s2 - cns2
    # d2 >= 0  =>  t <= 0 ; clamp guards fp cancellation in the decomposition.
    t = jnp.minimum(t, 0.0)

    # gaussian basis: exp(-(dist * sigma)^2)
    o_ref[...] = jnp.exp(t).astype(o_ref.dtype)


def _round_up(a: int, b: int) -> int:
    return ((a + b - 1) // b) * b


def _round_down(a: int, b: int) -> int:
    return (a // b) * b


def _fit_tile(requested: int, dim: int, align: int) -> int:
    """Largest tile <= requested that is `align`-aligned and never exceeds dim."""
    if dim <= align:
        return dim  # single block equal to the full dim (always legal)
    return max(align, min(requested, _round_down(dim, align)))


def _vmem_bytes(tn: int, tk: int, d: int) -> int:
    # Double-buffered f32 working set: x, ||x||^2, ct_scaled, col consts, out.
    per_step = (tn * d + tn + d * tk + 2 * tk + tn * tk) * 4
    return 2 * per_step


def _vmem_capacity_bytes() -> int:
    try:
        return int(pltpu.get_tpu_info().vmem_capacity_bytes)
    except Exception:
        return 64 * 1024 * 1024  # conservative: v7x per-TC VMEM


_VMEM_CAP = _vmem_capacity_bytes()


@functools.partial(
    jax.jit, static_argnames=("tile_n", "tile_k", "out_dtype", "force_pallas")
)
def rbf_layer_forward(
    x,
    centres,
    sigmas,
    *,
    tile_n: int = 512,
    tile_k: int = 512,
    out_dtype=jnp.float32,
    force_pallas: bool = False,
):
    """x: (N, in_features), centres: (K, in_features), sigmas: (K,) -> (N, K)."""
    N, D = x.shape
    K, Dc = centres.shape
    assert D == Dc
    assert sigmas.shape == (K,)

    x32 = x.astype(jnp.float32)
    c32 = centres.astype(jnp.float32)
    s32 = sigmas.astype(jnp.float32)

    # --- Tiny-problem fallback: pallas_call launch overhead would dominate,
    #     XLA's fused path is faster and avoids any tiling.
    if (not force_pallas) and N * K <= (tile_n * tile_k) // 2:
        d2 = (
            jnp.sum(x32 * x32, axis=-1, keepdims=True)
            + jnp.sum(c32 * c32, axis=-1)[None, :]
            - 2.0 * (x32 @ c32.T)
        )
        d2 = jnp.maximum(d2, 0.0)
        return jnp.exp(-d2 * (s32 * s32)[None, :]).astype(out_dtype)

    # --- Tile selection: lane-dense (tk multiple of 128), sublane-aligned
    #     (tn multiple of 8), never exceeding the logical dims (partial final
    #     blocks handle ragged edges; no padding, no output slice).
    tn = _fit_tile(tile_n, N, 8)
    tk = _fit_tile(tile_k, K, 128)

    # Generation-aware VMEM cap (64 MiB/TC on v7x vs 128 MiB v5e/v6e): shrink
    # tiles only if the double-buffered working set would overflow (large D).
    budget = (_VMEM_CAP * 3) // 4  # headroom for compiler-internal scratch
    while _vmem_bytes(tn, tk, D) > budget and (tn > 8 or tk > 128):
        if tn >= tk and tn > 8:
            tn = max(8, _round_down(tn // 2, 8))
        elif tk > 128:
            tk = max(128, _round_down(tk // 2, 128))
        else:
            tn = max(8, _round_down(tn // 2, 8))
    vmem_limit = max(32 << 20, min(budget, _vmem_bytes(tn, tk, D) + (8 << 20)))

    # --- Wrapper-side precompute (plain XLA ops): fold 2*sigma^2 into the
    #     transposed centres, merge sigma^2 and ||c||^2*sigma^2 into one array.
    x_norm2 = jnp.sum(x32 * x32, axis=-1, keepdims=True)        # (N, 1)
    s2 = s32 * s32                                               # (K,)
    ct_scaled = c32.T * (2.0 * s2)[None, :]                      # (D, K)
    cns2 = jnp.sum(c32 * c32, axis=-1) * s2                      # (K,)
    col_consts = jnp.stack([s2, cns2], axis=0)                   # (2, K)

    grid = (pl.cdiv(N, tn), pl.cdiv(K, tk))

    out = pl.pallas_call(
        rbf_kernel,
        out_shape=jax.ShapeDtypeStruct((N, K), out_dtype),
        grid_spec=pltpu.PrefetchScalarGridSpec(
            num_scalar_prefetch=0,
            grid=grid,
            in_specs=[
                pl.BlockSpec((tn, D), lambda i, j: (i, 0)),   # x rows
                pl.BlockSpec((tn, 1), lambda i, j: (i, 0)),   # ||x||^2
                pl.BlockSpec((D, tk), lambda i, j: (0, j)),   # centres^T * 2s^2
                pl.BlockSpec((2, tk), lambda i, j: (0, j)),   # [s^2 ; ||c||^2 s^2]
            ],
            out_specs=pl.BlockSpec((tn, tk), lambda i, j: (i, j)),
        ),
        compiler_params=pltpu.CompilerParams(
            # Both grid axes are independent -> megacore / 2-TC sharding on v7x.
            dimension_semantics=("parallel", "parallel"),
            vmem_limit_bytes=int(vmem_limit),
        ),
    )(x32, x_norm2, ct_scaled, col_consts)

    return out


def _reference(x, centres, sigmas):
    # Direct port of the torch forward (gaussian basis), computed in f32.
    diff = x[:, None, :].astype(jnp.float32) - centres[None, :, :].astype(jnp.float32)
    dist = jnp.sqrt(jnp.sum(diff * diff, axis=-1)) * sigmas[None, :]
    return jnp.exp(-(dist * dist))


if __name__ == "__main__":
    key = jax.random.PRNGKey(0)
    ks = jax.random.split(key, 8)

    # --- Test 1: module-canonical small shapes, forcing the Pallas path.
    N1, D1, K1 = 8, 32, 128
    x1 = jax.random.normal(ks[0], (N1, D1), dtype=jnp.float32)
    # reset_parameters(): centres ~ N(0, 1), sigmas = 0.01
    c1 = jax.random.normal(ks[1], (K1, D1), dtype=jnp.float32)
    s1 = jnp.full((K1,), 0.01, dtype=jnp.float32)

    out1 = jax.block_until_ready(rbf_layer_forward(x1, c1, s1, force_pallas=True))
    ref1 = _reference(x1, c1, s1)
    assert out1.shape == (N1, K1)
    assert jnp.allclose(out1, ref1, atol=2e-5, rtol=1e-4), float(
        jnp.max(jnp.abs(out1 - ref1))
    )

    # Same shapes through the tiny-problem XLA fallback path (default flags).
    out1b = jax.block_until_ready(rbf_layer_forward(x1, c1, s1))
    assert jnp.allclose(out1b, ref1, atol=2e-5, rtol=1e-4)

    # --- Test 2: non-aligned shapes -> partial final blocks on both grid axes,
    #     no wrapper-side padding and no output slice.
    N2, D2, K2 = 700, 48, 300
    x2 = jax.random.normal(ks[2], (N2, D2), dtype=jnp.float32)
    c2 = jax.random.normal(ks[3], (K2, D2), dtype=jnp.float32)
    s2 = jax.random.uniform(ks[4], (K2,), minval=0.05, maxval=0.5, dtype=jnp.float32)

    out2 = jax.block_until_ready(rbf_layer_forward(x2, c2, s2))
    ref2 = _reference(x2, c2, s2)
    assert out2.shape == (N2, K2)
    assert jnp.allclose(out2, ref2, atol=2e-5, rtol=1e-4), float(
        jnp.max(jnp.abs(out2 - ref2))
    )

    # --- Test 3: aligned multi-tile grid + bf16 output store (halves the
    #     dominant HBM write traffic; exp still computed in f32).
    N3, D3, K3 = 1024, 64, 640
    x3 = jax.random.normal(ks[5], (N3, D3), dtype=jnp.float32)
    c3 = jax.random.normal(ks[6], (K3, D3), dtype=jnp.float32)
    s3 = jax.random.uniform(ks[7], (K3,), minval=0.05, maxval=0.5, dtype=jnp.float32)

    out3 = jax.block_until_ready(
        rbf_layer_forward(x3, c3, s3, out_dtype=jnp.bfloat16)
    )
    ref3 = _reference(x3, c3, s3)
    assert out3.shape == (N3, K3) and out3.dtype == jnp.bfloat16
    assert jnp.allclose(out3.astype(jnp.float32), ref3, atol=5e-3, rtol=5e-3), float(
        jnp.max(jnp.abs(out3.astype(jnp.float32) - ref3))
    )

    print("KERNEL_OK")
</pallas_src>

<mosaic_0001>
module attributes {stable_mosaic.version = 11 : i64} {
  func.func @rbf_kernel(%arg0: i32, %arg1: i32, %arg2: memref<8x32xf32, #tpu.memory_space<vmem>>, %arg3: memref<8x1xf32, #tpu.memory_space<vmem>>, %arg4: memref<32x128xf32, #tpu.memory_space<vmem>>, %arg5: memref<2x128xf32, #tpu.memory_space<vmem>>, %arg6: memref<8x128xf32, #tpu.memory_space<vmem>>) attributes {dimension_semantics = [#tpu.dimension_semantics<parallel>, #tpu.dimension_semantics<parallel>], iteration_bounds = array<i64: 1, 1>, scalar_prefetch = 0 : i64, scratch_operands = 0 : i64, tpu.core_type = #tpu.core_type<tc>, window_params = [{transform_indices = @transform_0, window_bounds = array<i64: 8, 32>}, {transform_indices = @transform_1, window_bounds = array<i64: 8, 1>}, {transform_indices = @transform_2, window_bounds = array<i64: 32, 128>}, {transform_indices = @transform_3, window_bounds = array<i64: 2, 128>}, {transform_indices = @transform_4, window_bounds = array<i64: 8, 128>}]} {
    %c0 = arith.constant 0 : index
    %c0_0 = arith.constant 0 : index
    %0 = vector.load %arg2[%c0, %c0_0] : memref<8x32xf32, #tpu.memory_space<vmem>>, vector<8x32xf32>
    %c0_1 = arith.constant 0 : index
    %c0_2 = arith.constant 0 : index
    %1 = vector.load %arg4[%c0_1, %c0_2] : memref<32x128xf32, #tpu.memory_space<vmem>>, vector<32x128xf32>
    %cst = arith.constant dense<0.000000e+00> : vector<8x128xf32>
    %2 = tpu.matmul %0, %1, %cst {dimension_numbers = #tpu.dot_dimension_numbers<[1], [0], [0], [1], [0, 0, 1, 1], [], []>} : vector<8x32xf32>, vector<32x128xf32>, vector<8x128xf32> -> vector<8x128xf32>
    %c0_3 = arith.constant 0 : index
    %c0_4 = arith.constant 0 : index
    %3 = vector.load %arg5[%c0_3, %c0_4] : memref<2x128xf32, #tpu.memory_space<vmem>>, vector<2x128xf32>
    %4 = vector.extract_strided_slice %3 {offsets = [0, 0], sizes = [1, 128], strides = [1, 1]} : vector<2x128xf32> to vector<1x128xf32>
    %5 = vector.extract_strided_slice %3 {offsets = [1, 0], sizes = [1, 128], strides = [1, 1]} : vector<2x128xf32> to vector<1x128xf32>
    %c0_5 = arith.constant 0 : index
    %c0_6 = arith.constant 0 : index
    %6 = vector.load %arg3[%c0_5, %c0_6] : memref<8x1xf32, #tpu.memory_space<vmem>>, vector<8x1xf32>
    %7 = vector.broadcast %6 : vector<8x1xf32> to vector<8x128xf32>
    %8 = vector.broadcast %4 : vector<1x128xf32> to vector<8x128xf32>
    %9 = arith.mulf %7, %8 : vector<8x128xf32>
    %10 = arith.subf %2, %9 : vector<8x128xf32>
    %11 = vector.broadcast %5 : vector<1x128xf32> to vector<8x128xf32>
    %12 = arith.subf %10, %11 : vector<8x128xf32>
    %cst_7 = arith.constant 0.000000e+00 : f32
    %13 = vector.broadcast %cst_7 : f32 to vector<8x128xf32>
    %14 = arith.minimumf %12, %13 : vector<8x128xf32>
    %15 = math.exp %14 : vector<8x128xf32>
    %c0_8 = arith.constant 0 : index
    %c0_9 = arith.constant 0 : index
    %16 = vector.load %arg6[%c0_8, %c0_9] : memref<8x128xf32, #tpu.memory_space<vmem>>, vector<8x128xf32>
    tpu.vector_store %arg6[%c0_8, %c0_9], %15 {strides = array<i32>} : memref<8x128xf32, #tpu.memory_space<vmem>>, vector<8x128xf32>,
    return
  }
  func.func @transform_0(%arg0: i32, %arg1: i32) -> (i32, i32) {
    %c0_i32 = arith.constant 0 : i32
    %c0_i32_0 = arith.constant 0 : i32
    return %arg0, %c0_i32 : i32, i32
  }
  func.func @transform_1(%arg0: i32, %arg1: i32) -> (i32, i32) {
    %c0_i32 = arith.constant 0 : i32
    %c0_i32_0 = arith.constant 0 : i32
    return %arg0, %c0_i32 : i32, i32
  }
  func.func @transform_2(%arg0: i32, %arg1: i32) -> (i32, i32) {
    %c0_i32 = arith.constant 0 : i32
    %c0_i32_0 = arith.constant 0 : i32
    return %c0_i32, %arg1 : i32, i32
  }
  func.func @transform_3(%arg0: i32, %arg1: i32) -> (i32, i32) {
    %c0_i32 = arith.constant 0 : i32
    %c0_i32_0 = arith.constant 0 : i32
    return %c0_i32, %arg1 : i32, i32
  }
  func.func @transform_4(%arg0: i32, %arg1: i32) -> (i32, i32) {
    %c0_i32 = arith.constant 0 : i32
    return %arg0, %arg1 : i32, i32
  }
}

</mosaic_0001>

<llo_original>
// kernel: rbf_layer_forward.1
$region0: #{rbf_layer_forward.1}
  #allocation0 [shape = 'u32[]', space=smem, size = 0x4, offset = 0x4, fixed_abs, tag = 'smem constant byte address 0x4 - core index']
  #allocation1 [shape = 'u32[144,128]{1,0:T(1,128)}', space=vmem, size = 0x12000, scoped, tag = 'internal scratch']
  %s0 = inlined_call_operand.vmem [shape: f32[8,32], index: 0, kind: input, shape index: {}]
  %s1 = inlined_call_operand.vmem [shape: f32[8,1], index: 1, kind: input, shape index: {}]
  %s2 = inlined_call_operand.vmem [shape: f32[32,128], index: 2, kind: input, shape index: {}]
  %s3 = inlined_call_operand.vmem [shape: f32[2,128], index: 3, kind: input, shape index: {}]
  %s4 = inlined_call_operand.hbm [shape: f32[8,128], index: 4, kind: output, shape index: {}]
  %s5 = sld [smem:[#allocation0]]
  $region26: #{rbf_layer_forward.1} parent=0
    _
  %s7 = ssub.s32 1, %s5
  %s8 = scalar_select 0, %s7, %s5
  $region1: #{rbf_layer_forward.1} parent=0
    #allocation2 [shape = 'u8[4096]{0}', space=vmem, size = 0x1000, scoped, tag = 'output window, operand 0, single buffered']
    #allocation3 [shape = 's32[1]{0}', space=sflag, size = 0x4, scoped, tag = 'scoped memory for rbf_layer_forward.1']
    %9 = vsyncpa [#allocation3], 0
    // Predicated region
    $region2: #{rbf_layer_forward.1} parent=1 // pred_check
      _
    $region3: #{rbf_layer_forward.1} parent=1 // pred_check_branch
      %11 = sbr.rel (0) target = $region5
    $region4: #{rbf_layer_forward.1} parent=1 // pred_region
      _
    $region5: #{rbf_layer_forward.1} parent=1 // pred_fallthru
      _
    // Predicated region
    $region6: #{rbf_layer_forward.1} parent=1 // pred_check
      _
    $region7: #{rbf_layer_forward.1} parent=1 // pred_check_branch
      %13 = sbr.rel (0) target = $region9
    $region8: #{rbf_layer_forward.1} parent=1 // pred_region
      _
    $region9: #{rbf_layer_forward.1} parent=1 // pred_fallthru
      _
    // Predicated region
    $region10: #{rbf_layer_forward.1} parent=1 // pred_check
      _
    $region11: #{rbf_layer_forward.1} parent=1 // pred_check_branch
      %15 = sbr.rel (0) target = $region13
    $region12: #{rbf_layer_forward.1} parent=1 // pred_region
      _
    $region13: #{rbf_layer_forward.1} parent=1 // pred_fallthru
      _
    // Predicated region
    $region14: #{rbf_layer_forward.1} parent=1 // pred_check
      _
    $region15: #{rbf_layer_forward.1} parent=1 // pred_check_branch
      %17 = sbr.rel (0) target = $region17
    $region16: #{rbf_layer_forward.1} parent=1 // pred_region
      _
    $region17: #{rbf_layer_forward.1} parent=1 // pred_fallthru
      _
    %v18 = vld [vmem:[%s0] sm:$0xff]
    %v19 = vld [vmem:[%s2] sm:$0xff]
    %v20 = vld [vmem:[%s2 + $0x8] sm:$0xff]
    %v21 = vld [vmem:[%s2 + $0x10] sm:$0xff]
    %v22 = vld [vmem:[%s2 + $0x18] sm:$0xff]
    %vm23 = vcmask 261120
    %v25 = vsel %vm23, %v18, 0
    %27 = vmatprep.subr.mxu0 0.0
    %28 = vmatpush1.msra.mxu0 %v19
    %29 = vmatprep.subr.mxu0 0.0
    %30 = vmatpush1.msra.mxu0 %v20
    %31 = vmatprep.subr.mxu0 0.0
    %32 = vmatpush1.msra.mxu0 %v21
    %33 = vmatprep.subr.mxu0 0.0
    %34 = vmatpush1.msra.mxu0 %v22
    %35 = vmatprep.subr.mxu0 0.0
    %36 = vmatpush1.msra.mxu0 0.0
    %37 = vmatprep.subr.mxu0 0.0
    %38 = vmatpush1.msra.mxu0 0.0
    %39 = vmatprep.subr.mxu0 0.0
    %40 = vmatpush1.msra.mxu0 0.0
    %41 = vmatprep.subr.mxu0 0.0
    %42 = vmatpush1.msra.mxu0 0.0
    %43 = vmatprep.subr.mxu0 0.0
    %44 = vmatpush1.msra.mxu0 0.0
    %45 = vmatprep.subr.mxu0 0.0
    %46 = vmatpush1.msra.mxu0 0.0
    %47 = vmatprep.subr.mxu0 0.0
    %48 = vmatpush1.msra.mxu0 0.0
    %49 = vmatprep.subr.mxu0 0.0
    %50 = vmatpush1.msra.mxu0 0.0
    %51 = vmatprep.subr.mxu0 0.0
    %52 = vmatpush1.msra.mxu0 0.0
    %53 = vmatprep.subr.mxu0 0.0
    %54 = vmatpush1.msra.mxu0 0.0
    %55 = vmatprep.subr.mxu0 0.0
    %56 = vmatpush1.msra.mxu0 0.0
    %57 = vmatprep.subr.mxu0 0.0
    %58 = vmatpush1.msra.mxu0 0.0
    %59 = vmatprep.subr.mxu0 0.0
    %60 = vmatpush1.msra.mxu0 0.0
    %61 = vmatprep.subr.mxu0 0.0
    %62 = vmatpush1.msra.mxu0 0.0
    %63 = vmatprep.subr.mxu0 0.0
    %64 = vmatpush1.msra.mxu0 0.0
    %65 = vmatprep.subr.mxu0 0.0
    %66 = vmatpush1.msra.mxu0 0.0
    %67 = vmatprep.subr.mxu0 0.0
    %68 = vmatpush1.msra.mxu0 0.0
    %69 = vmatprep.subr.mxu0 0.0
    %70 = vmatpush1.msra.mxu0 0.0
    %71 = vmatprep.subr.mxu0 0.0
    %72 = vmatpush1.msra.mxu0 0.0
    %73 = vmatprep.subr.mxu0 0.0
    %74 = vmatpush1.msra.mxu0 0.0
    %75 = vmatprep.subr.mxu0 0.0
    %76 = vmatpush1.msra.mxu0 0.0
    %77 = vmatprep.subr.mxu0 0.0
    %78 = vmatpush1.msra.mxu0 0.0
    %79 = vmatprep.subr.mxu0 0.0
    %80 = vmatpush1.msra.mxu0 0.0
    %81 = vmatprep.subr.mxu0 0.0
    %82 = vmatpush1.msra.mxu0 0.0
    %83 = vmatprep.subr.mxu0 0.0
    %84 = vmatpush1.msra.mxu0 0.0
    %85 = vmatprep.subr.mxu0 0.0
    %86 = vmatpush1.msra.mxu0 0.0
    %87 = vmatprep.subr.mxu0 0.0
    %88 = vmatpush1.msra.mxu0 0.0
    %89 = vmatprep.subr.mxu0 0.0
    %90 = vmatpush1.msra.mxu0 0.0
    %91 = vmatprep.mubr.f32.mxu0 0.0
    %92 = vmatmul.mubr.f32.gmra.mrb[0].mxu0 %v25
    %v93 = vpop.f32.mrb[0].mxu0
    %v94 = vadd.f32 0.0, %v93
    %v95 = vpop.f32.mrb[0].mxu0
    %96 = vdwg.mxu0
    %v97 = vld [vmem:[%s3] sm:$0x3]
    %v98 = vld [vmem:[%s1] sm:$0xff]
    %100 = vset.pattern.permute.xlu0 0
    %101 = vperm.xlu0 %100, %v98
    %v102 = vpop.permute.xlu0 %101
    %v104 = vlaneseq
    %v105 = vshrl.u32 %v104, 7
    %v106 = vsub.s32 0, %v105
    %v107 = vrot.slane %v97, %v106
    %v108 = vmul.f32 %v102, %v107
    %v109 = vsub.f32 %v94, %v108
    %v110 = vlaneseq
    %v111 = vshrl.u32 %v110, 7
    %v112 = vsub.s32 1, %v111
    %v113 = vrot.slane %v97, %v112
    %v114 = vsub.f32 %v109, %v113
    %v115 = vmin.f32 %v114, 0.0
    %v116 = vmul.f32 %v115, 1.442695
    %v117 = vpow.pop %v116
    %118 = vst [vmem:[#allocation2] sm:$0xff] %v117
    // Predicated region
    $region18: #{rbf_layer_forward.1} parent=1 // pred_check
      _
    $region19: #{rbf_layer_forward.1} parent=1 // pred_check_branch
      %120 = sbr.rel (0) target = $region21
    $region20: #{rbf_layer_forward.1} parent=1 // pred_region
      %s122 = ssub.s32 128, 128
      %123 = vsyncadd [#allocation3], %s122
      %s125 = sshll.u32 [#allocation2], 4
      %s126 = int_to_ptr.vmem [resolvable:$true] %s125
      %128 = dma.vmem_to_hbm [thread:$0]  %s126, 128, %s4, [#allocation3]
    $region21: #{rbf_layer_forward.1} parent=1 // pred_fallthru
      _
    // Predicated region
    $region22: #{rbf_layer_forward.1} parent=1 // pred_check
      _
    $region23: #{rbf_layer_forward.1} parent=1 // pred_check_branch
      %130 = sbr.rel (0) target = $region25
    $region24: #{rbf_layer_forward.1} parent=1 // pred_region
      %131 = dma.done [#allocation3], 128
    $region25: #{rbf_layer_forward.1} parent=1 // pred_fallthru
      _
    %132 = vsyncpa [#allocation3], 1

</llo_original>
